<compile_context>
chip_gen: v6e
topology: v6e:2x2x1
jax: 0.10.0
libtpu: 0.0.40
codegen_flags: <defaults>
</compile_context>

<pallas_src>
import functools

import jax
import jax.numpy as jnp
from jax.experimental import pallas as pl
from jax.experimental.pallas import tpu as pltpu

_LANES = 128


def iris_mlp_kernel(x_ref, w1_ref, b1_ref, w2_ref, b2_ref, w3_ref, b3_ref, o_ref):
    # x: (4, TILE_N) with the batch on the lane axis -> every op is lane-dense.
    x = x_ref[...]

    w1 = w1_ref[...]  # (10, 4)
    b1 = b1_ref[...]  # (10, 1)
    w2 = w2_ref[...]  # (6, 10)
    b2 = b2_ref[...]  # (6, 1)
    w3 = w3_ref[...]  # (3, 6)
    b3 = b3_ref[...]  # (3, 1)

    # hidden1: Linear(4 -> 10) + ReLU. K=4 broadcast multiply-adds on the VPU
    # (the MXU would be ~97% idle at these contraction sizes). Bias folded into
    # the k=0 term instead of a separate add pass.
    h1 = w1[:, 0:1] * x[0:1, :] + b1
    for k in range(1, 4):
        h1 = h1 + w1[:, k:k + 1] * x[k:k + 1, :]
    h1 = jnp.maximum(h1, 0.0)

    # dropout(p=0.2): eval-mode semantics -> identity.
    # TODO(synk): training-mode dropout (pltpu.prng_seed + stateful_bernoulli mask
    # with 1/(1-p) scaling) not emitted.

    # hidden2: Linear(10 -> 6) + ReLU
    h2 = w2[:, 0:1] * h1[0:1, :] + b2
    for k in range(1, 10):
        h2 = h2 + w2[:, k:k + 1] * h1[k:k + 1, :]
    h2 = jnp.maximum(h2, 0.0)

    # output: Linear(6 -> 3)
    out = w3[:, 0:1] * h2[0:1, :] + b3
    for k in range(1, 6):
        out = out + w3[:, k:k + 1] * h2[k:k + 1, :]
    o_ref[...] = out


def _choose_tiling(n, tile_n_max):
    """Pick (tile, n_blocks, n_pad) with tile a lane multiple, minimal padding,
    and >=2 grid blocks whenever the batch allows it (v7x dual-TC sharding)."""
    tile_n_max = max(_LANES, (tile_n_max // _LANES) * _LANES)
    n_up = max(_LANES, pl.cdiv(n, _LANES) * _LANES)
    n_blocks = pl.cdiv(n_up, tile_n_max)
    if n_blocks == 1 and n_up >= 2 * _LANES:
        n_blocks = 2
    tile = pl.cdiv(pl.cdiv(n_up, n_blocks), _LANES) * _LANES
    return tile, n_blocks, n_blocks * tile


def _iris_pallas(xt, params, tile_n, n_blocks):
    """Core call. xt: (4, n_pad) f32 with n_pad = n_blocks * tile_n. Returns (3, n_pad)."""
    w1, b1, w2, b2, w3, b3 = params
    n_pad = xt.shape[1]

    weight_bytes = (10 * 4 + 10 + 6 * 10 + 6 + 3 * 6 + 3) * 4
    cost = pl.CostEstimate(
        flops=2 * n_pad * (4 * 10 + 10 * 6 + 6 * 3),
        transcendentals=0,
        bytes_accessed=n_pad * (4 + 3) * 4 + weight_bytes,
    )

    return pl.pallas_call(
        iris_mlp_kernel,
        out_shape=jax.ShapeDtypeStruct((3, n_pad), jnp.float32),
        grid=(n_blocks,),
        in_specs=[
            pl.BlockSpec((4, tile_n), lambda i: (0, i)),   # x tile (streamed, double-buffered)
            pl.BlockSpec((10, 4), lambda i: (0, 0)),        # w1 (resident across grid)
            pl.BlockSpec((10, 1), lambda i: (0, 0)),        # b1
            pl.BlockSpec((6, 10), lambda i: (0, 0)),        # w2
            pl.BlockSpec((6, 1), lambda i: (0, 0)),         # b2
            pl.BlockSpec((3, 6), lambda i: (0, 0)),         # w3
            pl.BlockSpec((3, 1), lambda i: (0, 0)),         # b3
        ],
        out_specs=pl.BlockSpec((3, tile_n), lambda i: (0, i)),
        compiler_params=pltpu.CompilerParams(
            dimension_semantics=("parallel",),
            vmem_limit_bytes=32 * 1024 * 1024,
        ),
        cost_estimate=cost,
    )(xt, w1, b1, w2, b2, w3, b3)


@functools.partial(jax.jit, static_argnames=("tile_n",))
def iris_forward(x, params, *, tile_n=32768):
    """x: (N, 4) float32 (natural PyTorch layout). Returns (N, 3) float32.

    Layout-sensitive consumers can instead call `_iris_pallas` on a (4, n_pad)
    feature-major slab and skip the final slice+transpose entirely.
    """
    n = x.shape[0]
    tile, n_blocks, n_pad = _choose_tiling(n, tile_n)

    # Single fused pad+transpose (no zeros + dynamic_update_slice materialization).
    xt = jnp.pad(x, ((0, n_pad - n), (0, 0))).T  # (4, n_pad); padded cols sliced off below

    out_t = _iris_pallas(xt, params, tile, n_blocks)
    return out_t[:, :n].T


def init_params(key):
    # PyTorch nn.Linear layout: weight (out, in); bias stored as (out, 1) so it
    # broadcasts along the lane (batch) axis inside the kernel.
    k1, k2, k3, k4, k5, k6 = jax.random.split(key, 6)

    def uniform_init(k, shape, fan_in):
        bound = 1.0 / jnp.sqrt(fan_in)
        return jax.random.uniform(k, shape, jnp.float32, -bound, bound)

    w1 = uniform_init(k1, (10, 4), 4.0)
    b1 = uniform_init(k2, (10, 1), 4.0)
    w2 = uniform_init(k3, (6, 10), 10.0)
    b2 = uniform_init(k4, (6, 1), 10.0)
    w3 = uniform_init(k5, (3, 6), 6.0)
    b3 = uniform_init(k6, (3, 1), 6.0)
    return (w1, b1, w2, b2, w3, b3)


def reference_forward(x, params):
    w1, b1, w2, b2, w3, b3 = params
    h1 = jnp.maximum(x @ w1.T + b1.T, 0.0)
    h2 = jnp.maximum(h1 @ w2.T + b2.T, 0.0)
    return h2 @ w3.T + b3.T


if __name__ == "__main__":
    key = jax.random.PRNGKey(0)
    pkey, xkey = jax.random.split(key)
    params = init_params(pkey)

    # Small shape consistent with the module (batch=8, features=4).
    x = jax.random.normal(xkey, (8, 4), dtype=jnp.float32)
    out = jax.block_until_ready(iris_forward(x, params))
    ref = reference_forward(x, params)
    assert out.shape == (8, 3)
    assert jnp.allclose(out, ref, atol=1e-5, rtol=1e-5)

    # Also exercise the multi-block (>=2 grid steps) + ragged-padding path.
    x2 = jax.random.normal(jax.random.PRNGKey(1), (300, 4), dtype=jnp.float32)
    out2 = jax.block_until_ready(iris_forward(x2, params))
    ref2 = reference_forward(x2, params)
    assert out2.shape == (300, 3)
    assert jnp.allclose(out2, ref2, atol=1e-5, rtol=1e-5)

    print("KERNEL_OK")
</pallas_src>

<mosaic_0001>
module attributes {stable_mosaic.version = 11 : i64} {
  func.func @iris_mlp_kernel(%arg0: i32, %arg1: memref<4x128xf32, #tpu.memory_space<vmem>>, %arg2: memref<10x4xf32, #tpu.memory_space<vmem>>, %arg3: memref<10x1xf32, #tpu.memory_space<vmem>>, %arg4: memref<6x10xf32, #tpu.memory_space<vmem>>, %arg5: memref<6x1xf32, #tpu.memory_space<vmem>>, %arg6: memref<3x6xf32, #tpu.memory_space<vmem>>, %arg7: memref<3x1xf32, #tpu.memory_space<vmem>>, %arg8: memref<3x128xf32, #tpu.memory_space<vmem>>) attributes {dimension_semantics = [#tpu.dimension_semantics<parallel>], iteration_bounds = array<i64: 1>, scalar_prefetch = 0 : i64, scratch_operands = 0 : i64, tpu.core_type = #tpu.core_type<tc>, window_params = [{transform_indices = @transform_0, window_bounds = array<i64: 4, 128>}, {pipeline_mode = #tpu.pipeline_mode<synchronous>, transform_indices = @transform_1, window_bounds = array<i64: 10, 4>}, {pipeline_mode = #tpu.pipeline_mode<synchronous>, transform_indices = @transform_2, window_bounds = array<i64: 10, 1>}, {pipeline_mode = #tpu.pipeline_mode<synchronous>, transform_indices = @transform_3, window_bounds = array<i64: 6, 10>}, {pipeline_mode = #tpu.pipeline_mode<synchronous>, transform_indices = @transform_4, window_bounds = array<i64: 6, 1>}, {pipeline_mode = #tpu.pipeline_mode<synchronous>, transform_indices = @transform_5, window_bounds = array<i64: 3, 6>}, {pipeline_mode = #tpu.pipeline_mode<synchronous>, transform_indices = @transform_6, window_bounds = array<i64: 3, 1>}, {transform_indices = @transform_7, window_bounds = array<i64: 3, 128>}]} {
    %c0 = arith.constant 0 : index
    %c0_0 = arith.constant 0 : index
    %0 = vector.load %arg1[%c0, %c0_0] : memref<4x128xf32, #tpu.memory_space<vmem>>, vector<4x128xf32>
    %c0_1 = arith.constant 0 : index
    %c0_2 = arith.constant 0 : index
    %1 = vector.load %arg2[%c0_1, %c0_2] : memref<10x4xf32, #tpu.memory_space<vmem>>, vector<10x4xf32>
    %c0_3 = arith.constant 0 : index
    %c0_4 = arith.constant 0 : index
    %2 = vector.load %arg3[%c0_3, %c0_4] : memref<10x1xf32, #tpu.memory_space<vmem>>, vector<10x1xf32>
    %c0_5 = arith.constant 0 : index
    %c0_6 = arith.constant 0 : index
    %3 = vector.load %arg4[%c0_5, %c0_6] : memref<6x10xf32, #tpu.memory_space<vmem>>, vector<6x10xf32>
    %c0_7 = arith.constant 0 : index
    %c0_8 = arith.constant 0 : index
    %4 = vector.load %arg5[%c0_7, %c0_8] : memref<6x1xf32, #tpu.memory_space<vmem>>, vector<6x1xf32>
    %c0_9 = arith.constant 0 : index
    %c0_10 = arith.constant 0 : index
    %5 = vector.load %arg6[%c0_9, %c0_10] : memref<3x6xf32, #tpu.memory_space<vmem>>, vector<3x6xf32>
    %c0_11 = arith.constant 0 : index
    %c0_12 = arith.constant 0 : index
    %6 = vector.load %arg7[%c0_11, %c0_12] : memref<3x1xf32, #tpu.memory_space<vmem>>, vector<3x1xf32>
    %7 = vector.extract_strided_slice %1 {offsets = [0, 0], sizes = [10, 1], strides = [1, 1]} : vector<10x4xf32> to vector<10x1xf32>
    %8 = vector.extract_strided_slice %0 {offsets = [0, 0], sizes = [1, 128], strides = [1, 1]} : vector<4x128xf32> to vector<1x128xf32>
    %9 = vector.broadcast %7 : vector<10x1xf32> to vector<10x128xf32>
    %10 = vector.broadcast %8 : vector<1x128xf32> to vector<10x128xf32>
    %11 = arith.mulf %9, %10 : vector<10x128xf32>
    %12 = vector.broadcast %2 : vector<10x1xf32> to vector<10x128xf32>
    %13 = arith.addf %11, %12 : vector<10x128xf32>
    %14 = vector.extract_strided_slice %1 {offsets = [0, 1], sizes = [10, 1], strides = [1, 1]} : vector<10x4xf32> to vector<10x1xf32>
    %15 = vector.extract_strided_slice %0 {offsets = [1, 0], sizes = [1, 128], strides = [1, 1]} : vector<4x128xf32> to vector<1x128xf32>
    %16 = vector.broadcast %14 : vector<10x1xf32> to vector<10x128xf32>
    %17 = vector.broadcast %15 : vector<1x128xf32> to vector<10x128xf32>
    %18 = arith.mulf %16, %17 : vector<10x128xf32>
    %19 = arith.addf %13, %18 : vector<10x128xf32>
    %20 = vector.extract_strided_slice %1 {offsets = [0, 2], sizes = [10, 1], strides = [1, 1]} : vector<10x4xf32> to vector<10x1xf32>
    %21 = vector.extract_strided_slice %0 {offsets = [2, 0], sizes = [1, 128], strides = [1, 1]} : vector<4x128xf32> to vector<1x128xf32>
    %22 = vector.broadcast %20 : vector<10x1xf32> to vector<10x128xf32>
    %23 = vector.broadcast %21 : vector<1x128xf32> to vector<10x128xf32>
    %24 = arith.mulf %22, %23 : vector<10x128xf32>
    %25 = arith.addf %19, %24 : vector<10x128xf32>
    %26 = vector.extract_strided_slice %1 {offsets = [0, 3], sizes = [10, 1], strides = [1, 1]} : vector<10x4xf32> to vector<10x1xf32>
    %27 = vector.extract_strided_slice %0 {offsets = [3, 0], sizes = [1, 128], strides = [1, 1]} : vector<4x128xf32> to vector<1x128xf32>
    %28 = vector.broadcast %26 : vector<10x1xf32> to vector<10x128xf32>
    %29 = vector.broadcast %27 : vector<1x128xf32> to vector<10x128xf32>
    %30 = arith.mulf %28, %29 : vector<10x128xf32>
    %31 = arith.addf %25, %30 : vector<10x128xf32>
    %cst = arith.constant 0.000000e+00 : f32
    %32 = vector.broadcast %cst : f32 to vector<10x128xf32>
    %33 = arith.maximumf %31, %32 : vector<10x128xf32>
    %34 = vector.extract_strided_slice %3 {offsets = [0, 0], sizes = [6, 1], strides = [1, 1]} : vector<6x10xf32> to vector<6x1xf32>
    %35 = vector.extract_strided_slice %33 {offsets = [0, 0], sizes = [1, 128], strides = [1, 1]} : vector<10x128xf32> to vector<1x128xf32>
    %36 = vector.broadcast %34 : vector<6x1xf32> to vector<6x128xf32>
    %37 = vector.broadcast %35 : vector<1x128xf32> to vector<6x128xf32>
    %38 = arith.mulf %36, %37 : vector<6x128xf32>
    %39 = vector.broadcast %4 : vector<6x1xf32> to vector<6x128xf32>
    %40 = arith.addf %38, %39 : vector<6x128xf32>
    %41 = vector.extract_strided_slice %3 {offsets = [0, 1], sizes = [6, 1], strides = [1, 1]} : vector<6x10xf32> to vector<6x1xf32>
    %42 = vector.extract_strided_slice %33 {offsets = [1, 0], sizes = [1, 128], strides = [1, 1]} : vector<10x128xf32> to vector<1x128xf32>
    %43 = vector.broadcast %41 : vector<6x1xf32> to vector<6x128xf32>
    %44 = vector.broadcast %42 : vector<1x128xf32> to vector<6x128xf32>
    %45 = arith.mulf %43, %44 : vector<6x128xf32>
    %46 = arith.addf %40, %45 : vector<6x128xf32>
    %47 = vector.extract_strided_slice %3 {offsets = [0, 2], sizes = [6, 1], strides = [1, 1]} : vector<6x10xf32> to vector<6x1xf32>
    %48 = vector.extract_strided_slice %33 {offsets = [2, 0], sizes = [1, 128], strides = [1, 1]} : vector<10x128xf32> to vector<1x128xf32>
    %49 = vector.broadcast %47 : vector<6x1xf32> to vector<6x128xf32>
    %50 = vector.broadcast %48 : vector<1x128xf32> to vector<6x128xf32>
    %51 = arith.mulf %49, %50 : vector<6x128xf32>
    %52 = arith.addf %46, %51 : vector<6x128xf32>
    %53 = vector.extract_strided_slice %3 {offsets = [0, 3], sizes = [6, 1], strides = [1, 1]} : vector<6x10xf32> to vector<6x1xf32>
    %54 = vector.extract_strided_slice %33 {offsets = [3, 0], sizes = [1, 128], strides = [1, 1]} : vector<10x128xf32> to vector<1x128xf32>
    %55 = vector.broadcast %53 : vector<6x1xf32> to vector<6x128xf32>
    %56 = vector.broadcast %54 : vector<1x128xf32> to vector<6x128xf32>
    %57 = arith.mulf %55, %56 : vector<6x128xf32>
    %58 = arith.addf %52, %57 : vector<6x128xf32>
    %59 = vector.extract_strided_slice %3 {offsets = [0, 4], sizes = [6, 1], strides = [1, 1]} : vector<6x10xf32> to vector<6x1xf32>
    %60 = vector.extract_strided_slice %33 {offsets = [4, 0], sizes = [1, 128], strides = [1, 1]} : vector<10x128xf32> to vector<1x128xf32>
    %61 = vector.broadcast %59 : vector<6x1xf32> to vector<6x128xf32>
    %62 = vector.broadcast %60 : vector<1x128xf32> to vector<6x128xf32>
    %63 = arith.mulf %61, %62 : vector<6x128xf32>
    %64 = arith.addf %58, %63 : vector<6x128xf32>
    %65 = vector.extract_strided_slice %3 {offsets = [0, 5], sizes = [6, 1], strides = [1, 1]} : vector<6x10xf32> to vector<6x1xf32>
    %66 = vector.extract_strided_slice %33 {offsets = [5, 0], sizes = [1, 128], strides = [1, 1]} : vector<10x128xf32> to vector<1x128xf32>
    %67 = vector.broadcast %65 : vector<6x1xf32> to vector<6x128xf32>
    %68 = vector.broadcast %66 : vector<1x128xf32> to vector<6x128xf32>
    %69 = arith.mulf %67, %68 : vector<6x128xf32>
    %70 = arith.addf %64, %69 : vector<6x128xf32>
    %71 = vector.extract_strided_slice %3 {offsets = [0, 6], sizes = [6, 1], strides = [1, 1]} : vector<6x10xf32> to vector<6x1xf32>
    %72 = vector.extract_strided_slice %33 {offsets = [6, 0], sizes = [1, 128], strides = [1, 1]} : vector<10x128xf32> to vector<1x128xf32>
    %73 = vector.broadcast %71 : vector<6x1xf32> to vector<6x128xf32>
    %74 = vector.broadcast %72 : vector<1x128xf32> to vector<6x128xf32>
    %75 = arith.mulf %73, %74 : vector<6x128xf32>
    %76 = arith.addf %70, %75 : vector<6x128xf32>
    %77 = vector.extract_strided_slice %3 {offsets = [0, 7], sizes = [6, 1], strides = [1, 1]} : vector<6x10xf32> to vector<6x1xf32>
    %78 = vector.extract_strided_slice %33 {offsets = [7, 0], sizes = [1, 128], strides = [1, 1]} : vector<10x128xf32> to vector<1x128xf32>
    %79 = vector.broadcast %77 : vector<6x1xf32> to vector<6x128xf32>
    %80 = vector.broadcast %78 : vector<1x128xf32> to vector<6x128xf32>
    %81 = arith.mulf %79, %80 : vector<6x128xf32>
    %82 = arith.addf %76, %81 : vector<6x128xf32>
    %83 = vector.extract_strided_slice %3 {offsets = [0, 8], sizes = [6, 1], strides = [1, 1]} : vector<6x10xf32> to vector<6x1xf32>
    %84 = vector.extract_strided_slice %33 {offsets = [8, 0], sizes = [1, 128], strides = [1, 1]} : vector<10x128xf32> to vector<1x128xf32>
    %85 = vector.broadcast %83 : vector<6x1xf32> to vector<6x128xf32>
    %86 = vector.broadcast %84 : vector<1x128xf32> to vector<6x128xf32>
    %87 = arith.mulf %85, %86 : vector<6x128xf32>
    %88 = arith.addf %82, %87 : vector<6x128xf32>
    %89 = vector.extract_strided_slice %3 {offsets = [0, 9], sizes = [6, 1], strides = [1, 1]} : vector<6x10xf32> to vector<6x1xf32>
    %90 = vector.extract_strided_slice %33 {offsets = [9, 0], sizes = [1, 128], strides = [1, 1]} : vector<10x128xf32> to vector<1x128xf32>
    %91 = vector.broadcast %89 : vector<6x1xf32> to vector<6x128xf32>
    %92 = vector.broadcast %90 : vector<1x128xf32> to vector<6x128xf32>
    %93 = arith.mulf %91, %92 : vector<6x128xf32>
    %94 = arith.addf %88, %93 : vector<6x128xf32>
    %cst_13 = arith.constant 0.000000e+00 : f32
    %95 = vector.broadcast %cst_13 : f32 to vector<6x128xf32>
    %96 = arith.maximumf %94, %95 : vector<6x128xf32>
    %97 = vector.extract_strided_slice %5 {offsets = [0, 0], sizes = [3, 1], strides = [1, 1]} : vector<3x6xf32> to vector<3x1xf32>
    %98 = vector.extract_strided_slice %96 {offsets = [0, 0], sizes = [1, 128], strides = [1, 1]} : vector<6x128xf32> to vector<1x128xf32>
    %99 = vector.broadcast %97 : vector<3x1xf32> to vector<3x128xf32>
    %100 = vector.broadcast %98 : vector<1x128xf32> to vector<3x128xf32>
    %101 = arith.mulf %99, %100 : vector<3x128xf32>
    %102 = vector.broadcast %6 : vector<3x1xf32> to vector<3x128xf32>
    %103 = arith.addf %101, %102 : vector<3x128xf32>
    %104 = vector.extract_strided_slice %5 {offsets = [0, 1], sizes = [3, 1], strides = [1, 1]} : vector<3x6xf32> to vector<3x1xf32>
    %105 = vector.extract_strided_slice %96 {offsets = [1, 0], sizes = [1, 128], strides = [1, 1]} : vector<6x128xf32> to vector<1x128xf32>
    %106 = vector.broadcast %104 : vector<3x1xf32> to vector<3x128xf32>
    %107 = vector.broadcast %105 : vector<1x128xf32> to vector<3x128xf32>
    %108 = arith.mulf %106, %107 : vector<3x128xf32>
    %109 = arith.addf %103, %108 : vector<3x128xf32>
    %110 = vector.extract_strided_slice %5 {offsets = [0, 2], sizes = [3, 1], strides = [1, 1]} : vector<3x6xf32> to vector<3x1xf32>
    %111 = vector.extract_strided_slice %96 {offsets = [2, 0], sizes = [1, 128], strides = [1, 1]} : vector<6x128xf32> to vector<1x128xf32>
    %112 = vector.broadcast %110 : vector<3x1xf32> to vector<3x128xf32>
    %113 = vector.broadcast %111 : vector<1x128xf32> to vector<3x128xf32>
    %114 = arith.mulf %112, %113 : vector<3x128xf32>
    %115 = arith.addf %109, %114 : vector<3x128xf32>
    %116 = vector.extract_strided_slice %5 {offsets = [0, 3], sizes = [3, 1], strides = [1, 1]} : vector<3x6xf32> to vector<3x1xf32>
    %117 = vector.extract_strided_slice %96 {offsets = [3, 0], sizes = [1, 128], strides = [1, 1]} : vector<6x128xf32> to vector<1x128xf32>
    %118 = vector.broadcast %116 : vector<3x1xf32> to vector<3x128xf32>
    %119 = vector.broadcast %117 : vector<1x128xf32> to vector<3x128xf32>
    %120 = arith.mulf %118, %119 : vector<3x128xf32>
    %121 = arith.addf %115, %120 : vector<3x128xf32>
    %122 = vector.extract_strided_slice %5 {offsets = [0, 4], sizes = [3, 1], strides = [1, 1]} : vector<3x6xf32> to vector<3x1xf32>
    %123 = vector.extract_strided_slice %96 {offsets = [4, 0], sizes = [1, 128], strides = [1, 1]} : vector<6x128xf32> to vector<1x128xf32>
    %124 = vector.broadcast %122 : vector<3x1xf32> to vector<3x128xf32>
    %125 = vector.broadcast %123 : vector<1x128xf32> to vector<3x128xf32>
    %126 = arith.mulf %124, %125 : vector<3x128xf32>
    %127 = arith.addf %121, %126 : vector<3x128xf32>
    %128 = vector.extract_strided_slice %5 {offsets = [0, 5], sizes = [3, 1], strides = [1, 1]} : vector<3x6xf32> to vector<3x1xf32>
    %129 = vector.extract_strided_slice %96 {offsets = [5, 0], sizes = [1, 128], strides = [1, 1]} : vector<6x128xf32> to vector<1x128xf32>
    %130 = vector.broadcast %128 : vector<3x1xf32> to vector<3x128xf32>
    %131 = vector.broadcast %129 : vector<1x128xf32> to vector<3x128xf32>
    %132 = arith.mulf %130, %131 : vector<3x128xf32>
    %133 = arith.addf %127, %132 : vector<3x128xf32>
    %c0_14 = arith.constant 0 : index
    %c0_15 = arith.constant 0 : index
    %134 = vector.load %arg8[%c0_14, %c0_15] : memref<3x128xf32, #tpu.memory_space<vmem>>, vector<3x128xf32>
    tpu.vector_store %arg8[%c0_14, %c0_15], %133 {strides = array<i32>} : memref<3x128xf32, #tpu.memory_space<vmem>>, vector<3x128xf32>,
    return
  }
  func.func @transform_0(%arg0: i32) -> (i32, i32) {
    %c0_i32 = arith.constant 0 : i32
    %c0_i32_0 = arith.constant 0 : i32
    return %c0_i32, %arg0 : i32, i32
  }
  func.func @transform_1(%arg0: i32) -> (i32, i32) {
    %c0_i32 = arith.constant 0 : i32
    %c0_i32_0 = arith.constant 0 : i32
    %c0_i32_1 = arith.constant 0 : i32
    return %c0_i32, %c0_i32_0 : i32, i32
  }
  func.func @transform_2(%arg0: i32) -> (i32, i32) {
    %c0_i32 = arith.constant 0 : i32
    %c0_i32_0 = arith.constant 0 : i32
    %c0_i32_1 = arith.constant 0 : i32
    return %c0_i32, %c0_i32_0 : i32, i32
  }
  func.func @transform_3(%arg0: i32) -> (i32, i32) {
    %c0_i32 = arith.constant 0 : i32
    %c0_i32_0 = arith.constant 0 : i32
    %c0_i32_1 = arith.constant 0 : i32
    return %c0_i32, %c0_i32_0 : i32, i32
  }
  func.func @transform_4(%arg0: i32) -> (i32, i32) {
    %c0_i32 = arith.constant 0 : i32
    %c0_i32_0 = arith.constant 0 : i32
    %c0_i32_1 = arith.constant 0 : i32
    return %c0_i32, %c0_i32_0 : i32, i32
  }
  func.func @transform_5(%arg0: i32) -> (i32, i32) {
    %c0_i32 = arith.constant 0 : i32
    %c0_i32_0 = arith.constant 0 : i32
    %c0_i32_1 = arith.constant 0 : i32
    return %c0_i32, %c0_i32_0 : i32, i32
  }
  func.func @transform_6(%arg0: i32) -> (i32, i32) {
    %c0_i32 = arith.constant 0 : i32
    %c0_i32_0 = arith.constant 0 : i32
    %c0_i32_1 = arith.constant 0 : i32
    return %c0_i32, %c0_i32_0 : i32, i32
  }
  func.func @transform_7(%arg0: i32) -> (i32, i32) {
    %c0_i32 = arith.constant 0 : i32
    %c0_i32_0 = arith.constant 0 : i32
    return %c0_i32, %arg0 : i32, i32
  }
}

</mosaic_0001>

<llo_original>
// kernel: iris_forward.1
$region0: #{iris_forward.1}
  #allocation0 [shape = 'u32[]', space=smem, size = 0x4, offset = 0x4, fixed_abs, tag = 'smem constant byte address 0x4 - core index']
  #allocation1 [shape = 'u32[144,128]{1,0:T(1,128)}', space=vmem, size = 0x12000, scoped, tag = 'internal scratch']
  %s0 = inlined_call_operand.vmem [shape: f32[4,128], index: 0, kind: input, shape index: {}]
  %s1 = inlined_call_operand.vmem [shape: f32[10,4], index: 1, kind: input, shape index: {}]
  %s2 = inlined_call_operand.vmem [shape: f32[10,1], index: 2, kind: input, shape index: {}]
  %s3 = inlined_call_operand.vmem [shape: f32[6,10], index: 3, kind: input, shape index: {}]
  %s4 = inlined_call_operand.vmem [shape: f32[6,1], index: 4, kind: input, shape index: {}]
  %s5 = inlined_call_operand.vmem [shape: f32[3,6], index: 5, kind: input, shape index: {}]
  %s6 = inlined_call_operand.vmem [shape: f32[3,1], index: 6, kind: input, shape index: {}]
  %s7 = inlined_call_operand.vmem [shape: f32[3,128], index: 7, kind: output, shape index: {}]
  %s8 = sld [smem:[#allocation0]]
  $region38: #{iris_forward.1} parent=0
    _
  %s10 = ssub.s32 1, %s8
  %s11 = scalar_select 0, %s10, %s8
  // Predicated region
  $region2: #{iris_forward.1} parent=0 // pred_check
    _
  $region3: #{iris_forward.1} parent=0 // pred_check_branch
    %13 = sbr.rel (0) target = $region5
  $region4: #{iris_forward.1} parent=0 // pred_region
    _
  $region5: #{iris_forward.1} parent=0 // pred_fallthru
    _
  // Predicated region
  $region6: #{iris_forward.1} parent=0 // pred_check
    _
  $region7: #{iris_forward.1} parent=0 // pred_check_branch
    %15 = sbr.rel (0) target = $region9
  $region8: #{iris_forward.1} parent=0 // pred_region
    _
  $region9: #{iris_forward.1} parent=0 // pred_fallthru
    _
  // Predicated region
  $region10: #{iris_forward.1} parent=0 // pred_check
    _
  $region11: #{iris_forward.1} parent=0 // pred_check_branch
    %17 = sbr.rel (0) target = $region13
  $region12: #{iris_forward.1} parent=0 // pred_region
    _
  $region13: #{iris_forward.1} parent=0 // pred_fallthru
    _
  // Predicated region
  $region14: #{iris_forward.1} parent=0 // pred_check
    _
  $region15: #{iris_forward.1} parent=0 // pred_check_branch
    %19 = sbr.rel (0) target = $region17
  $region16: #{iris_forward.1} parent=0 // pred_region
    _
  $region17: #{iris_forward.1} parent=0 // pred_fallthru
    _
  // Predicated region
  $region18: #{iris_forward.1} parent=0 // pred_check
    _
  $region19: #{iris_forward.1} parent=0 // pred_check_branch
    %21 = sbr.rel (0) target = $region21
  $region20: #{iris_forward.1} parent=0 // pred_region
    _
  $region21: #{iris_forward.1} parent=0 // pred_fallthru
    _
  // Predicated region
  $region22: #{iris_forward.1} parent=0 // pred_check
    _
  $region23: #{iris_forward.1} parent=0 // pred_check_branch
    %23 = sbr.rel (0) target = $region25
  $region24: #{iris_forward.1} parent=0 // pred_region
    _
  $region25: #{iris_forward.1} parent=0 // pred_fallthru
    _
  // Predicated region
  $region26: #{iris_forward.1} parent=0 // pred_check
    _
  $region27: #{iris_forward.1} parent=0 // pred_check_branch
    %25 = sbr.rel (0) target = $region29
  $region28: #{iris_forward.1} parent=0 // pred_region
    _
  $region29: #{iris_forward.1} parent=0 // pred_fallthru
    _
  %v26 = vld [vmem:[%s0] sm:$0xf]
  %v27 = vld [vmem:[%s1] sm:$0xff]
  %v28 = vld [vmem:[%s1 + $0x8] sm:$0x3]
  %v29 = vld [vmem:[%s2] sm:$0xff]
  %v30 = vld [vmem:[%s2 + $0x8] sm:$0x3]
  %v31 = vld [vmem:[%s3] sm:$0x3f]
  %v32 = vld [vmem:[%s4] sm:$0x3f]
  %v33 = vld [vmem:[%s5] sm:$0x7]
  %v34 = vld [vmem:[%s6] sm:$0x7]
  %36 = vset.pattern.permute.xlu0 0
  %37 = vperm.xlu0 %36, %v27
  %v38 = vpop.permute.xlu0 %37
  %41 = vset.pattern.permute.xlu0 0
  %42 = vperm.xlu0 %41, %v28
  %v43 = vpop.permute.xlu0 %42
  %v45 = vlaneseq
  %v46 = vshrl.u32 %v45, 7
  %v47 = vsub.s32 0, %v46
  %v48 = vrot.slane %v26, %v47
  %v49 = vmul.f32 %v38, %v48
  %v50 = vmul.f32 %v43, %v48
  %52 = vset.pattern.permute.xlu0 0
  %53 = vperm.xlu0 %52, %v29
  %v54 = vpop.permute.xlu0 %53
  %57 = vset.pattern.permute.xlu0 0
  %58 = vperm.xlu0 %57, %v30
  %v59 = vpop.permute.xlu0 %58
  %v61 = vadd.f32 %v49, %v54
  %v62 = vadd.f32 %v50, %v59
  %63 = vset.pattern.permute.xlu0 1
  %64 = vperm.xlu0 %63, %v27
  %v65 = vpop.permute.xlu0 %64
  %67 = vset.pattern.permute.xlu0 1
  %68 = vperm.xlu0 %67, %v28
  %v69 = vpop.permute.xlu0 %68
  %v71 = vlaneseq
  %v72 = vshrl.u32 %v71, 7
  %v73 = vsub.s32 1, %v72
  %v74 = vrot.slane %v26, %v73
  %v75 = vmul.f32 %v65, %v74
  %v76 = vmul.f32 %v69, %v74
  %v77 = vadd.f32 %v61, %v75
  %v78 = vadd.f32 %v62, %v76
  %79 = vset.pattern.permute.xlu0 2
  %80 = vperm.xlu0 %79, %v27
  %v81 = vpop.permute.xlu0 %80
  %83 = vset.pattern.permute.xlu0 2
  %84 = vperm.xlu0 %83, %v28
  %v85 = vpop.permute.xlu0 %84
  %v87 = vlaneseq
  %v88 = vshrl.u32 %v87, 7
  %v89 = vsub.s32 2, %v88
  %v90 = vrot.slane %v26, %v89
  %v91 = vmul.f32 %v81, %v90
  %v92 = vmul.f32 %v85, %v90
  %v93 = vadd.f32 %v77, %v91
  %v94 = vadd.f32 %v78, %v92
  %95 = vset.pattern.permute.xlu0 3
  %96 = vperm.xlu0 %95, %v27
  %v97 = vpop.permute.xlu0 %96
  %99 = vset.pattern.permute.xlu0 3
  %100 = vperm.xlu0 %99, %v28
  %v101 = vpop.permute.xlu0 %100
  %v103 = vlaneseq
  %v104 = vshrl.u32 %v103, 7
  %v105 = vsub.s32 3, %v104
  %v106 = vrot.slane %v26, %v105
  %v107 = vmul.f32 %v97, %v106
  %v108 = vmul.f32 %v101, %v106
  %v109 = vadd.f32 %v93, %v107
  %v110 = vadd.f32 %v94, %v108
  %v111 = vmax.f32 %v109, 0.0
  %v112 = vmax.f32 %v110, 0.0
  %114 = vset.pattern.permute.xlu0 0
  %115 = vperm.xlu0 %114, %v31
  %v116 = vpop.permute.xlu0 %115
  %v118 = vlaneseq
  %v119 = vshrl.u32 %v118, 7
  %v120 = vsub.s32 0, %v119
  %v121 = vrot.slane %v111, %v120
  %v122 = vmul.f32 %v116, %v121
  %124 = vset.pattern.permute.xlu0 0
  %125 = vperm.xlu0 %124, %v32
  %v126 = vpop.permute.xlu0 %125
  %v128 = vadd.f32 %v122, %v126
  %129 = vset.pattern.permute.xlu0 1
  %130 = vperm.xlu0 %129, %v31
  %v131 = vpop.permute.xlu0 %130
  %v133 = vlaneseq
  %v134 = vshrl.u32 %v133, 7
  %v135 = vsub.s32 1, %v134
  %v136 = vrot.slane %v111, %v135
  %v137 = vmul.f32 %v131, %v136
  %v138 = vadd.f32 %v128, %v137
  %139 = vset.pattern.permute.xlu0 2
  %140 = vperm.xlu0 %139, %v31
  %v141 = vpop.permute.xlu0 %140
  %v143 = vlaneseq
  %v144 = vshrl.u32 %v143, 7
  %v145 = vsub.s32 2, %v144
  %v146 = vrot.slane %v111, %v145
  %v147 = vmul.f32 %v141, %v146
  %v148 = vadd.f32 %v138, %v147
  %149 = vset.pattern.permute.xlu0 3
  %150 = vperm.xlu0 %149, %v31
  %v151 = vpop.permute.xlu0 %150
  %v153 = vlaneseq
  %v154 = vshrl.u32 %v153, 7
  %v155 = vsub.s32 3, %v154
  %v156 = vrot.slane %v111, %v155
  %v157 = vmul.f32 %v151, %v156
  %v158 = vadd.f32 %v148, %v157
  %159 = vset.pattern.permute.xlu0 4
  %160 = vperm.xlu0 %159, %v31
  %v161 = vpop.permute.xlu0 %160
  %v163 = vlaneseq
  %v164 = vshrl.u32 %v163, 7
  %v165 = vsub.s32 4, %v164
  %v166 = vrot.slane %v111, %v165
  %v167 = vmul.f32 %v161, %v166
  %v168 = vadd.f32 %v158, %v167
  %169 = vset.pattern.permute.xlu0 5
  %170 = vperm.xlu0 %169, %v31
  %v171 = vpop.permute.xlu0 %170
  %v173 = vlaneseq
  %v174 = vshrl.u32 %v173, 7
  %v175 = vsub.s32 5, %v174
  %v176 = vrot.slane %v111, %v175
  %v177 = vmul.f32 %v171, %v176
  %v178 = vadd.f32 %v168, %v177
  %179 = vset.pattern.permute.xlu0 6
  %180 = vperm.xlu0 %179, %v31
  %v181 = vpop.permute.xlu0 %180
  %v183 = vlaneseq
  %v184 = vshrl.u32 %v183, 7
  %v185 = vsub.s32 6, %v184
  %v186 = vrot.slane %v111, %v185
  %v187 = vmul.f32 %v181, %v186
  %v188 = vadd.f32 %v178, %v187
  %189 = vset.pattern.permute.xlu0 7
  %190 = vperm.xlu0 %189, %v31
  %v191 = vpop.permute.xlu0 %190
  %v193 = vlaneseq
  %v194 = vshrl.u32 %v193, 7
  %v195 = vsub.s32 7, %v194
  %v196 = vrot.slane %v111, %v195
  %v197 = vmul.f32 %v191, %v196
  %v198 = vadd.f32 %v188, %v197
  %199 = vset.pattern.permute.xlu0 8
  %200 = vperm.xlu0 %199, %v31
  %v201 = vpop.permute.xlu0 %200
  %v203 = vlaneseq
  %v204 = vshrl.u32 %v203, 7
  %v205 = vsub.s32 0, %v204
  %v206 = vrot.slane %v112, %v205
  %v207 = vmul.f32 %v201, %v206
  %v208 = vadd.f32 %v198, %v207
  %209 = vset.pattern.permute.xlu0 9
  %210 = vperm.xlu0 %209, %v31
  %v211 = vpop.permute.xlu0 %210
  %v213 = vlaneseq
  %v214 = vshrl.u32 %v213, 7
  %v215 = vsub.s32 1, %v214
  %v216 = vrot.slane %v112, %v215
  %v217 = vmul.f32 %v211, %v216
  %v218 = vadd.f32 %v208, %v217
  %v219 = vmax.f32 %v218, 0.0
  %221 = vset.pattern.permute.xlu0 0
  %222 = vperm.xlu0 %221, %v33
  %v223 = vpop.permute.xlu0 %222
  %v225 = vlaneseq
  %v226 = vshrl.u32 %v225, 7
  %v227 = vsub.s32 0, %v226
  %v228 = vrot.slane %v219, %v227
  %v229 = vmul.f32 %v223, %v228
  %231 = vset.pattern.permute.xlu0 0
  %232 = vperm.xlu0 %231, %v34
  %v233 = vpop.permute.xlu0 %232
  %v235 = vadd.f32 %v229, %v233
  %236 = vset.pattern.permute.xlu0 1
  %237 = vperm.xlu0 %236, %v33
  %v238 = vpop.permute.xlu0 %237
  %v240 = vlaneseq
  %v241 = vshrl.u32 %v240, 7
  %v242 = vsub.s32 1, %v241
  %v243 = vrot.slane %v219, %v242
  %v244 = vmul.f32 %v238, %v243
  %v245 = vadd.f32 %v235, %v244
  %246 = vset.pattern.permute.xlu0 2
  %247 = vperm.xlu0 %246, %v33
  %v248 = vpop.permute.xlu0 %247
  %v250 = vlaneseq
  %v251 = vshrl.u32 %v250, 7
  %v252 = vsub.s32 2, %v251
  %v253 = vrot.slane %v219, %v252
  %v254 = vmul.f32 %v248, %v253
  %v255 = vadd.f32 %v245, %v254
  %256 = vset.pattern.permute.xlu0 3
  %257 = vperm.xlu0 %256, %v33
  %v258 = vpop.permute.xlu0 %257
  %v260 = vlaneseq
  %v261 = vshrl.u32 %v260, 7
  %v262 = vsub.s32 3, %v261
  %v263 = vrot.slane %v219, %v262
  %v264 = vmul.f32 %v258, %v263
  %v265 = vadd.f32 %v255, %v264
  %266 = vset.pattern.permute.xlu0 4
  %267 = vperm.xlu0 %266, %v33
  %v268 = vpop.permute.xlu0 %267
  %v270 = vlaneseq
  %v271 = vshrl.u32 %v270, 7
  %v272 = vsub.s32 4, %v271
  %v273 = vrot.slane %v219, %v272
  %v274 = vmul.f32 %v268, %v273
  %v275 = vadd.f32 %v265, %v274
  %276 = vset.pattern.permute.xlu0 5
  %277 = vperm.xlu0 %276, %v33
  %v278 = vpop.permute.xlu0 %277
  %v280 = vlaneseq
  %v281 = vshrl.u32 %v280, 7
  %v282 = vsub.s32 5, %v281
  %v283 = vrot.slane %v219, %v282
  %v284 = vmul.f32 %v278, %v283
  %v285 = vadd.f32 %v275, %v284
  %286 = vst [vmem:[%s7] sm:$0x7] %v285
  // Predicated region
  $region30: #{iris_forward.1} parent=0 // pred_check
    _
  $region31: #{iris_forward.1} parent=0 // pred_check_branch
    %288 = sbr.rel (0) target = $region33
  $region32: #{iris_forward.1} parent=0 // pred_region
    _
  $region33: #{iris_forward.1} parent=0 // pred_fallthru
    _
  // Predicated region
  $region34: #{iris_forward.1} parent=0 // pred_check
    _
  $region35: #{iris_forward.1} parent=0 // pred_check_branch
    %290 = sbr.rel (0) target = $region37
  $region36: #{iris_forward.1} parent=0 // pred_region
    _
  $region37: #{iris_forward.1} parent=0 // pred_fallthru
    _

</llo_original>
